<compile_context>
chip_gen: v5e
topology: v5e:2x2
jax: 0.10.0
libtpu: 0.0.40
codegen_flags: <defaults>
</compile_context>

<pallas_src>
import jax
import jax.numpy as jnp
from jax.experimental import pallas as pl
from jax.experimental.pallas import tpu as pltpu


def _choose_tiling(B, C, HW, itemsize):
    """Pick (b_blk, tile_hw) so each grid step moves ~4 MiB of payload."""
    budget = 4 << 20                        # input + f32-output bytes per block
    bytes_per_pixel = C * itemsize + 4      # C input values + 1 f32 output lane

    if HW > 128 and HW % 128 == 0:
        tile_hw = (budget // bytes_per_pixel) // 128 * 128
        tile_hw = int(max(128, min(tile_hw, HW)))
    elif HW > 128 and HW * bytes_per_pixel > budget:
        # Large non-128-aligned HW: 128-multiple tile; the pl.cdiv grid handles
        # the partial tail block (reduction axis C is untiled, so it's safe).
        tile_hw = (budget // bytes_per_pixel) // 128 * 128
        tile_hw = int(max(128, min(tile_hw, (HW // 128) * 128)))
    else:
        tile_hw = HW                        # full extent: always a legal block

    # Batch-pack when a single spatial tile is far below the byte target
    # (small HW and/or tiny C) so the DMA payload per step approaches budget.
    b_blk = 1
    if tile_hw == HW:
        b_blk = int(min(B, max(1, budget // max(HW * bytes_per_pixel, 1))))

    # Keep >= 2 grid steps when the data allows it so v7x's two TensorCores
    # both get work (negligible extra overhead on 1-TC v5e/v6e).
    if pl.cdiv(B, b_blk) * pl.cdiv(HW, tile_hw) == 1:
        if B > 1:
            b_blk = pl.cdiv(B, 2)
        elif HW > 128:
            tile_hw = pl.cdiv(pl.cdiv(HW, 2), 128) * 128

    return b_blk, tile_hw


def _make_pool_kernel(mode, inv_c):
    if mode == "avg":
        def kernel(x_ref, o_ref):
            # x_ref: (b_blk, C, tile_hw) native dtype; o_ref: (b_blk, 1, tile_hw) f32
            s = jnp.sum(x_ref[...], axis=1, keepdims=True, dtype=jnp.float32)
            o_ref[...] = (s * inv_c).astype(o_ref.dtype)   # 1/C folded as constant
    elif mode == "max":
        def kernel(x_ref, o_ref):
            # Reduce in the native dtype (exact under monotone widening); cast
            # only the small (b_blk, 1, tile_hw) result.
            m = jnp.max(x_ref[...], axis=1, keepdims=True)
            o_ref[...] = m.astype(o_ref.dtype)
    else:
        raise ValueError(f"unsupported mode: {mode!r}")
    return kernel


def channel_pooling_block(x, mode="avg"):
    """x: (B, C, H, W) in any float dtype; returns (B, 1, H, W) float32."""
    B, C, H, W = x.shape
    HW = H * W
    xf = x.reshape(B, C, HW)                 # keep native dtype on the wire
    b_blk, tile_hw = _choose_tiling(B, C, HW, xf.dtype.itemsize)
    grid = (pl.cdiv(B, b_blk), pl.cdiv(HW, tile_hw))

    kernel = _make_pool_kernel(mode, 1.0 / C)

    cost = pl.CostEstimate(
        flops=B * C * HW,                    # one add/compare per input element
        transcendentals=0,
        bytes_accessed=B * C * HW * xf.dtype.itemsize + B * HW * 4,
    )

    # Safety net for the huge-C corner case where even the 128-lane floor block
    # blows past the default scoped-VMEM budget (not hit for typical shapes).
    in_block = b_blk * C * tile_hw * xf.dtype.itemsize
    out_block = b_blk * 1 * tile_hw * 4
    need = 2 * (in_block + out_block)        # double-buffered input + output
    cp_kwargs = dict(dimension_semantics=("parallel", "parallel"))
    if need > 12 * 1024 * 1024:
        cp_kwargs["vmem_limit_bytes"] = int(min(need + (4 << 20), 64 << 20))

    out = pl.pallas_call(
        kernel,
        out_shape=jax.ShapeDtypeStruct((B, 1, HW), jnp.float32),
        grid=grid,
        in_specs=[
            pl.BlockSpec((b_blk, C, tile_hw), lambda i, j: (i, 0, j)),
        ],
        out_specs=pl.BlockSpec((b_blk, 1, tile_hw), lambda i, j: (i, 0, j)),
        compiler_params=pltpu.CompilerParams(**cp_kwargs),
        cost_estimate=cost,
    )(xf)

    return out.reshape(B, 1, H, W)


def channel_pooling_ref(x, mode="avg"):
    # Pure-JAX reference mirroring the PyTorch forward (f32 output).
    xf = x.astype(jnp.float32)
    if mode == "avg":
        return jnp.mean(xf, axis=1, keepdims=True)
    return jnp.max(xf, axis=1, keepdims=True)


if __name__ == "__main__":
    k0, k1, k2 = jax.random.split(jax.random.PRNGKey(0), 3)
    ok = True

    # Primary shape consistent with the module: NCHW, small.
    B, C, H, W = 2, 4, 16, 16
    x = jax.random.normal(k0, (B, C, H, W), dtype=jnp.float32)
    for mode in ("avg", "max"):
        y = channel_pooling_block(x, mode=mode)
        jax.block_until_ready(y)
        y_ref = channel_pooling_ref(x, mode=mode)
        assert y.shape == (B, 1, H, W) and y.dtype == jnp.float32
        ok &= bool(jnp.allclose(y, y_ref, atol=1e-5, rtol=1e-5))

    # bf16 input: native-dtype max reduce / f32-accumulated sum paths.
    xb = jax.random.normal(k1, (B, C, H, W), dtype=jnp.bfloat16)
    for mode in ("avg", "max"):
        y = channel_pooling_block(xb, mode=mode)
        jax.block_until_ready(y)
        y_ref = channel_pooling_ref(xb, mode=mode)
        ok &= bool(jnp.allclose(y, y_ref, atol=1e-3, rtol=1e-3))

    # Non-128-aligned spatial size with B == 1 (full-extent block path).
    x2 = jax.random.normal(k2, (1, 6, 9, 13), dtype=jnp.float32)
    for mode in ("avg", "max"):
        y = channel_pooling_block(x2, mode=mode)
        jax.block_until_ready(y)
        y_ref = channel_pooling_ref(x2, mode=mode)
        assert y.shape == (1, 1, 9, 13)
        ok &= bool(jnp.allclose(y, y_ref, atol=1e-5, rtol=1e-5))

    assert ok
    print("KERNEL_OK")
</pallas_src>

<mosaic_0001>
module attributes {stable_mosaic.version = 11 : i64} {
  func.func @kernel(%arg0: i32, %arg1: i32, %arg2: memref<1x4x256xf32, #tpu.memory_space<vmem>>, %arg3: memref<1x1x256xf32, #tpu.memory_space<vmem>>) attributes {dimension_semantics = [#tpu.dimension_semantics<parallel>, #tpu.dimension_semantics<parallel>], iteration_bounds = array<i64: 2, 1>, scalar_prefetch = 0 : i64, scratch_operands = 0 : i64, tpu.core_type = #tpu.core_type<tc>, window_params = [{transform_indices = @transform_0, window_bounds = array<i64: 1, 4, 256>}, {transform_indices = @transform_1, window_bounds = array<i64: 1, 1, 256>}]} {
    %c0 = arith.constant 0 : index
    %c0_0 = arith.constant 0 : index
    %c0_1 = arith.constant 0 : index
    %0 = vector.load %arg2[%c0, %c0_0, %c0_1] : memref<1x4x256xf32, #tpu.memory_space<vmem>>, vector<1x4x256xf32>
    %cst = arith.constant dense<0.000000e+00> : vector<1x256xf32>
    %1 = vector.multi_reduction <add>, %0, %cst [1] : vector<1x4x256xf32> to vector<1x256xf32>
    %2 = vector.shape_cast %1 : vector<1x256xf32> to vector<1x1x256xf32>
    %cst_2 = arith.constant 2.500000e-01 : f32
    %3 = vector.broadcast %cst_2 : f32 to vector<1x1x256xf32>
    %4 = arith.mulf %2, %3 : vector<1x1x256xf32>
    %c0_3 = arith.constant 0 : index
    %c0_4 = arith.constant 0 : index
    %c0_5 = arith.constant 0 : index
    %5 = vector.load %arg3[%c0_3, %c0_4, %c0_5] : memref<1x1x256xf32, #tpu.memory_space<vmem>>, vector<1x1x256xf32>
    tpu.vector_store %arg3[%c0_3, %c0_4, %c0_5], %4 {strides = array<i32>} : memref<1x1x256xf32, #tpu.memory_space<vmem>>, vector<1x1x256xf32>,
    return
  }
  func.func @transform_0(%arg0: i32, %arg1: i32) -> (i32, i32, i32) {
    %c0_i32 = arith.constant 0 : i32
    %c0_i32_0 = arith.constant 0 : i32
    return %arg0, %c0_i32, %arg1 : i32, i32, i32
  }
  func.func @transform_1(%arg0: i32, %arg1: i32) -> (i32, i32, i32) {
    %c0_i32 = arith.constant 0 : i32
    %c0_i32_0 = arith.constant 0 : i32
    return %arg0, %c0_i32, %arg1 : i32, i32, i32
  }
}

</mosaic_0001>

<llo_original>
// kernel: tpu_custom_call.1
$region0: #{tpu_custom_call.1}
  #allocation0 [shape = 'u32[]', space=smem, size = 0x4, offset = 0x4, fixed_abs, tag = 'smem constant byte address 0x4 - core index']
  #allocation1 [shape = 'u32[72,128]{1,0:T(1,128)}', space=vmem, size = 0x9000, scoped, tag = 'internal scratch']
  %s0 = inlined_call_operand.hbm [shape: f32[2,4,256], index: 0, kind: input, shape index: {}]
  %s1 = inlined_call_operand.hbm [shape: f32[2,1,256], index: 1, kind: output, shape index: {}]
  %s2 = sld [smem:[#allocation0]]
  $region41: #{tpu_custom_call.1} parent=0
    _
  %s4 = ssub.s32 1, %s2
  %s5 = scalar_select 0, %s4, %s2
  $region1: #{tpu_custom_call.1} parent=0
    #allocation2 [shape = 'u8[8192]{0}', space=vmem, size = 0x2000, scoped, tag = 'input window, operand 0']
    #allocation3 [shape = 's32[2]{0}', space=sflag, size = 0x8, scoped, tag = 'scoped memory for tpu_custom_call.1']
    #allocation4 [shape = 's32[2]{0}', space=sflag, size = 0x8, scoped, tag = 'scoped memory for tpu_custom_call.1']
    #allocation5 [shape = 'u8[2048]{0}', space=vmem, size = 0x800, scoped, tag = 'output window, operand 0']
    %6 = vsyncpa [#allocation3], 0
    %s7 = scalar_lea.sflag [#allocation3], 1
    %8 = vsyncpa %s7, 0
    %9 = vsyncpa [#allocation4], 0
    %s10 = scalar_lea.sflag [#allocation4], 1
    %11 = vsyncpa %s10, 0
    loop: start=0, step=1, limit=4
    $region2: #{tpu_custom_call.1} parent=1 // loop_pre_header
      _
    $region3: #{tpu_custom_call.1} parent=1 // loop_header
      %s13 = sphi 0, %s17
      %p14 = scmp.ge.s32.totalorder %s13, 4
      %s20 = sphi 0, %s32
      %s21 = sphi 0, %s28
      %s22 = sphi 0, %s20
      %s23 = sphi 0, %s21
      %s24 = sphi 0, %s22
      %s25 = sphi 0, %s23
      %s37 = sphi 0, %s39
      %s40 = sphi 0, %s37
      %s41 = sphi 0, %s40
      %s57 = sphi 0, %s41
      %s65 = sphi 0, %s67
      %s68 = sphi 0, %s65
      %s69 = sphi 0, %s68
      %s85 = sphi 0, %s69
    $region4: #{tpu_custom_call.1} parent=1 // loop_header_branch
      %16 = sbr.rel (%p14) target = $region8
    $region5: #{tpu_custom_call.1} parent=1 // loop_body
      %s18 = ssub.s32 %s13, 1
      %s19 = ssub.s32 %s13, 2
      %s26 = sadd.s32 1, %s21
      %p27 = scmp.ge.s32.totalorder %s26, 1
      %s28 = scalar_select %p27, 0, %s26
      %s29 = sadd.s32 1, %s20
      %s30 = scalar_select %p27, %s29, %s20
      %p31 = scmp.ge.s32.totalorder %s30, 2
      %s32 = scalar_select %p31, 0, %s30
      %s33 = ssub.s32 %s20, %s32
      %s34 = ssub.s32 %s21, %s28
      %s35 = sor.u32 %s33, %s34
      %p36 = scmp.eq.s32.totalorder %s35, 0
      %s38 = sadd.s32 %s37, 1
      %s39 = scalar_select %p36, %s37, %s38
      %p42 = pneg %p36
      %p43 = scmp.eq.s32.totalorder %s13, 1
      %p44 = por %p42, %p43
      %p45 = scmp.ne.s32.totalorder %s37, %s40
      %p46 = scmp.eq.s32.totalorder %s13, 0
      %p47 = por %p45, %p46
      %p48 = scmp.ne.s32.totalorder %s37, %s40
      %p49 = scmp.eq.s32.totalorder %s18, 1
      %p50 = por %p48, %p49
      %p51 = scmp.ne.s32.totalorder %s40, %s41
      %p52 = scmp.eq.s32.totalorder %s18, 0
      %p53 = por %p51, %p52
      %p54 = scmp.ne.s32.totalorder %s40, %s41
      %p55 = scmp.eq.s32.totalorder %s19, 1
      %p56 = por %p54, %p55
      %p58 = scmp.ne.s32.totalorder %s41, %s57
      %p59 = scmp.eq.s32.totalorder %s19, 0
      %p60 = por %p58, %p59
      %s61 = ssub.s32 %s20, %s32
      %s62 = ssub.s32 %s21, %s28
      %s63 = sor.u32 %s61, %s62
      %p64 = scmp.eq.s32.totalorder %s63, 0
      %s66 = sadd.s32 %s65, 1
      %s67 = scalar_select %p64, %s65, %s66
      %p70 = pneg %p64
      %p71 = scmp.eq.s32.totalorder %s13, 1
      %p72 = por %p70, %p71
      %p73 = scmp.ne.s32.totalorder %s65, %s68
      %p74 = scmp.eq.s32.totalorder %s13, 0
      %p75 = por %p73, %p74
      %p76 = scmp.ne.s32.totalorder %s65, %s68
      %p77 = scmp.eq.s32.totalorder %s18, 1
      %p78 = por %p76, %p77
      %p79 = scmp.ne.s32.totalorder %s68, %s69
      %p80 = scmp.eq.s32.totalorder %s18, 0
      %p81 = por %p79, %p80
      %p82 = scmp.ne.s32.totalorder %s68, %s69
      %p83 = scmp.eq.s32.totalorder %s19, 1
      %p84 = por %p82, %p83
      %p86 = scmp.ne.s32.totalorder %s69, %s85
      %p87 = scmp.eq.s32.totalorder %s19, 0
      %p88 = por %p86, %p87
      %p89 = scmp.le.s32.totalorder 1, %s13
      %p90 = scmp.lt.s32.totalorder %s13, 3
      %p91 = pnand %p89, %p90
      %p92 = pneg %p91
      // Predicated region
      $region9: #{tpu_custom_call.1} parent=5 // pred_check
        _
      $region10: #{tpu_custom_call.1} parent=5 // pred_check_branch
        %94 = sbr.rel (%p91) target = $region12
      $region11: #{tpu_custom_call.1} parent=5 // pred_region
        %s95 = ssub.s32 %s13, 1
      $region12: #{tpu_custom_call.1} parent=5 // pred_fallthru
        _
      %p96 = scmp.lt.s32.totalorder %s13, 2
      // Predicated region
      $region13: #{tpu_custom_call.1} parent=5 // pred_check
        %p97 = pneg %p96
      $region14: #{tpu_custom_call.1} parent=5 // pred_check_branch
        %99 = sbr.rel (%p97) target = $region16
      $region15: #{tpu_custom_call.1} parent=5 // pred_region
        // Predicated region
        $region17: #{tpu_custom_call.1} parent=15 // pred_check
          %p100 = pneg %p47
        $region18: #{tpu_custom_call.1} parent=15 // pred_check_branch
          %102 = sbr.rel (%p100) target = $region20
        $region19: #{tpu_custom_call.1} parent=15 // pred_region
          %s103 = sand.u32 %s37, 1
          %s104 = scalar_lea.sflag [#allocation3], %s103
          %s105 = sand.u32 %s37, 1
          %s106 = smul.addr %s105, 8
          %s107 = scalar_lea.vmem [#allocation2], %s106
          %s108 = smul.u32 2, %s21
          %110 = vsyncadd %s104, 0
          %s111 = smul.addr %s20, 2
          %s112 = sadd.s32 %s108, %s111
          %s113 = smul.addr %s112, 4
          %s114 = scalar_lea.hbm %s0, %s113
          %s116 = sshll.u32 %s114, 4
          %s117 = int_to_ptr.hbm [resolvable:$true] %s116
          %s118 = sshll.u32 %s107, 4
          %s119 = int_to_ptr.vmem [resolvable:$true] %s118
          %121 = dma.hbm_to_vmem [thread:$0]  %s117, 128, %s119, %s104
        $region20: #{tpu_custom_call.1} parent=15 // pred_fallthru
          _
      $region16: #{tpu_custom_call.1} parent=5 // pred_fallthru
        _
      %p122 = scmp.le.s32.totalorder 1, %s13
      %p123 = scmp.lt.s32.totalorder %s13, 3
      %p124 = pnand %p122, %p123
      %p125 = pneg %p124
      // Predicated region
      $region21: #{tpu_custom_call.1} parent=5 // pred_check
        _
      $region22: #{tpu_custom_call.1} parent=5 // pred_check_branch
        %127 = sbr.rel (%p124) target = $region24
      $region23: #{tpu_custom_call.1} parent=5 // pred_region
        %s128 = ssub.s32 %s13, 1
        %s129 = sand.u32 %s40, 1
        %s130 = scalar_lea.sflag [#allocation3], %s129
        %s131 = sand.u32 %s40, 1
        %s132 = smul.addr %s131, 8
        %s133 = scalar_lea.vmem [#allocation2], %s132
        // Predicated region
        $region25: #{tpu_custom_call.1} parent=23 // pred_check
          %p134 = pneg %p53
        $region26: #{tpu_custom_call.1} parent=23 // pred_check_branch
          %136 = sbr.rel (%p134) target = $region28
        $region27: #{tpu_custom_call.1} parent=23 // pred_region
          %138 = dma.done %s130, 128
        $region28: #{tpu_custom_call.1} parent=23 // pred_fallthru
          _
        %s139 = sand.u32 %s40, 1
        %s140 = scalar_lea.sflag [#allocation3], %s139
        %s141 = sand.u32 %s40, 1
        %s142 = smul.addr %s141, 8
        %s143 = scalar_lea.vmem [#allocation2], %s142
        %p144 = pneg %p53
        %p145 = pneg %p50
        %p146 = pneg %p81
        %p147 = pneg %p78
        %s148 = sand.u32 %s68, 1
        %s149 = scalar_lea.sflag [#allocation4], %s148
        %s150 = sand.u32 %s68, 1
        %s151 = smul.addr %s150, 2
        %s152 = scalar_lea.vmem [#allocation5], %s151
        %s153 = smul.u32 2, %s23
        %s154 = smul.u32 2, %s23
        %v155 = vld [vmem:[%s133] sm:$0xff]
        %157 = vst [vmem:[#allocation1] ss:$2 sm:$0xff] %v155
        %v158 = vld.sshfl [vmem:[#allocation1] sm:$0xff pattern:$0x75316420]
        %v159 = vld.sshfl [vmem:[#allocation1 + $0x8] sm:$0xff pattern:$0x75316420]
        %vm162 = vcmask 1043456
        %v163 = vsel %vm162, %v158, 0.0
        %v164 = vrot.slane %v163, 4
        %v165 = vadd.f32 %v163, %v164
        %v166 = vrot.slane %v165, 2
        %v167 = vadd.f32 %v165, %v166
        %v168 = vrot.slane %v167, 1
        %v169 = vadd.f32 %v167, %v168
        %v170 = vsel %vm162, %v159, 0.0
        %v171 = vrot.slane %v170, 4
        %v172 = vadd.f32 %v170, %v171
        %v173 = vrot.slane %v172, 2
        %v174 = vadd.f32 %v172, %v173
        %v175 = vrot.slane %v174, 1
        %v176 = vadd.f32 %v174, %v175
        %v177 = vmul.f32 %v169, 0.25
        %v178 = vmul.f32 %v176, 0.25
        %v181 = vrot.slane %v178, 7
        %vm182 = vcmask 1040384
        %v183 = vsel %vm182, %v177, %v181
        %v185 = vlaneseq
        %vm186 = vcmp.ge.s32.totalorder %v185, 0
        %vm187 = vcmp.lt.s32.totalorder %v185, 256
        %vm188 = vmand %vm186, %vm187
        %189 = vst.msk [vmem:[%s152] sm:$0x3] %vm188, %v183
        %s190 = sand.u32 %s68, 1
        %s191 = scalar_lea.sflag [#allocation4], %s190
        %s192 = sand.u32 %s68, 1
        %s193 = smul.addr %s192, 2
        %s194 = scalar_lea.vmem [#allocation5], %s193
        // Predicated region
        $region29: #{tpu_custom_call.1} parent=23 // pred_check
          %p195 = pneg %p78
        $region30: #{tpu_custom_call.1} parent=23 // pred_check_branch
          %197 = sbr.rel (%p195) target = $region32
        $region31: #{tpu_custom_call.1} parent=23 // pred_region
          %s198 = smul.u32 2, %s23
          %200 = vsyncadd %s191, 0
          %s201 = smul.addr %s22, 2
          %s202 = sadd.s32 %s198, %s201
          %s203 = scalar_lea.hbm %s1, %s202
          %s205 = sshll.u32 %s194, 4
          %s206 = int_to_ptr.vmem [resolvable:$true] %s205
          %s207 = sshll.u32 %s203, 4
          %s208 = int_to_ptr.hbm [resolvable:$true] %s207
          %210 = dma.vmem_to_hbm [thread:$0]  %s206, 32, %s208, %s191
        $region32: #{tpu_custom_call.1} parent=23 // pred_fallthru
          _
      $region24: #{tpu_custom_call.1} parent=5 // pred_fallthru
        _
      %p211 = scmp.le.s32.totalorder 2, %s13
      // Predicated region
      $region33: #{tpu_custom_call.1} parent=5 // pred_check
        %p212 = pneg %p211
      $region34: #{tpu_custom_call.1} parent=5 // pred_check_branch
        %214 = sbr.rel (%p212) target = $region36
      $region35: #{tpu_custom_call.1} parent=5 // pred_region
        %s215 = ssub.s32 %s13, 2
        // Predicated region
        $region37: #{tpu_custom_call.1} parent=35 // pred_check
          %p216 = pneg %p84
        $region38: #{tpu_custom_call.1} parent=35 // pred_check_branch
          %218 = sbr.rel (%p216) target = $region40
        $region39: #{tpu_custom_call.1} parent=35 // pred_region
          %s219 = sand.u32 %s69, 1
          %s220 = scalar_lea.sflag [#allocation4], %s219
          %s221 = sand.u32 %s69, 1
          %s222 = smul.addr %s221, 2
          %s223 = scalar_lea.vmem [#allocation5], %s222
          %225 = dma.done %s220, 32
        $region40: #{tpu_custom_call.1} parent=35 // pred_fallthru
          _
      $region36: #{tpu_custom_call.1} parent=5 // pred_fallthru
        _
    $region6: #{tpu_custom_call.1} parent=1 // loop_footer
      %s17 = sadd.s32 1, %s13
    $region7: #{tpu_custom_call.1} parent=1 // loop_footer_branch
      %12 = sbr.rel target = $region3
    $region8: #{tpu_custom_call.1} parent=1 // loop_exit
      _
    %226 = vsyncpa [#allocation3], 1
    %s227 = scalar_lea.sflag [#allocation3], 1
    %228 = vsyncpa %s227, 1
    %229 = vsyncpa [#allocation4], 1
    %s230 = scalar_lea.sflag [#allocation4], 1
    %231 = vsyncpa %s230, 1

</llo_original>
